<compile_context>
chip_gen: v6e
topology: v6e:2x2x1
jax: 0.10.0
libtpu: 0.0.40
codegen_flags: <defaults>
</compile_context>

<pallas_src>
import functools

import jax
import jax.numpy as jnp
from jax import lax
from jax.experimental import pallas as pl
from jax.experimental.pallas import tpu as pltpu


def _expert_ffn_kernel(tile_eid_ref, x_ref, rw_ref, w1_ref, b1_ref, w2_ref, b2_ref,
                       out_ref, acc_ref):
    """One (row-tile, d_ff-chunk) step of the grouped expert FFN.

    The tile's expert is selected entirely through the data-dependent index_maps
    (tile_eid_ref is consumed there); the body is a plain FFN chunk with an f32
    VMEM accumulator over the d_ff axis and a per-row combine-weight scale at the end.
    """
    f = pl.program_id(1)

    @pl.when(f == 0)
    def _():
        acc_ref[...] = jnp.zeros_like(acc_ref)

    x = x_ref[...]                                                      # (tg, D)
    h = jnp.dot(x, w1_ref[...], preferred_element_type=jnp.float32)     # (tg, ffc) f32
    h = jnp.maximum(h + b1_ref[...].astype(jnp.float32), 0.0)
    h = h.astype(w2_ref.dtype)                                          # narrow MXU operand
    acc_ref[...] += jnp.dot(h, w2_ref[...], preferred_element_type=jnp.float32)

    @pl.when(f == pl.num_programs(1) - 1)
    def _():
        y = acc_ref[...] + b2_ref[...].astype(jnp.float32)              # (tg, D) f32
        # rw_ref: (tg, 1) f32 combine weight (0 for padding rows).  Eval dropout = id.
        out_ref[...] = (rw_ref[...] * y).astype(out_ref.dtype)


def moe_layer_pallas(x, gate_w, gate_b, w1, b1, w2, b2, *,
                     n_experts_per_token=2, tile_g=512, block_ff=None,
                     compute_dtype=None, vmem_limit_bytes=None):
    """Grouped top-k MoE forward (eval mode: t=1.0, dropout=identity).

    x: (seq, batch, d_model)   — matches the PyTorch x[token_idx, batch_idx] layout.
    gate_w: (d_model, E), gate_b: (E,)
    w1: (E, d_model, d_ff), b1: (E, d_ff), w2: (E, d_ff, d_model), b2: (E, d_model)

    tile_g: rows per grouped token tile (multiple of 8).  AI per tile ~= tile_g
        FLOPs per weight byte; use >= ~256-512 on v5e/v7x, ~768-1024 on v6e (bf16).
    block_ff: d_ff chunk per grid step (multiple of 128, divides d_ff) or None for
        full d_ff.  Use it when (tile_g, d_ff) f32 + double-buffered weight chunks
        would overflow VMEM (notably v7x's 64 MiB/TC).
    compute_dtype: e.g. jnp.bfloat16 to stream x / W1 / W2 narrow; None keeps dtypes.
    vmem_limit_bytes: scoped VMEM limit; <= ~56 MiB on v7x, up to ~100 MiB on v5e/v6e.
    """
    seq, batch, d_model = x.shape
    n_experts, _, d_ff = w1.shape
    k = n_experts_per_token
    if tile_g % 8 != 0:
        raise ValueError("tile_g must be a multiple of 8")
    ffc = d_ff if block_ff is None else int(block_ff)
    if d_ff % ffc != 0:
        raise ValueError("block_ff must divide d_ff")
    n_ff = d_ff // ffc

    T = seq * batch
    x2d = x.reshape(T, d_model)

    # ---- routing in f32 (gate -> top-k -> softmax), matching the reference exactly ----
    logits = jnp.dot(x2d.astype(jnp.float32), gate_w.astype(jnp.float32))
    logits = logits + gate_b.astype(jnp.float32)                  # t = 1.0 (eval)
    top_v, top_i = lax.top_k(logits, k)                           # (T, k)
    probs = jax.nn.softmax(top_v, axis=-1)                        # f32 (T, k)

    # ---- flatten dispatch entries and sort by expert ----
    S = T * k
    e_flat = top_i.reshape(S).astype(jnp.int32)
    w_flat = probs.reshape(S)
    t_flat = jnp.repeat(jnp.arange(T, dtype=jnp.int32), k)
    order = jnp.argsort(e_flat)
    e_sort, w_sort, t_sort = e_flat[order], w_flat[order], t_flat[order]

    # ---- pack into a padded slab where every row-tile belongs to one expert ----
    counts = jnp.bincount(e_flat, length=n_experts).astype(jnp.int32)          # (E,)
    tiles_per_e = (counts + tile_g - 1) // tile_g
    pad_end = (jnp.cumsum(tiles_per_e) * tile_g).astype(jnp.int32)
    pad_off = pad_end - tiles_per_e * tile_g
    raw_end = jnp.cumsum(counts).astype(jnp.int32)
    raw_off = raw_end - counts
    dest = pad_off[e_sort] + (jnp.arange(S, dtype=jnp.int32) - raw_off[e_sort])  # unique

    n_tiles = pl.cdiv(S, tile_g) + n_experts      # static upper bound on used tiles
    P = n_tiles * tile_g

    in_dtype = x.dtype if compute_dtype is None else compute_dtype
    x_slab = jnp.zeros((P, d_model), in_dtype).at[dest].set(x2d[t_sort].astype(in_dtype))
    rw_slab = jnp.zeros((P,), jnp.float32).at[dest].set(w_sort).reshape(P, 1)
    tok_slab = jnp.full((P,), T, jnp.int32).at[dest].set(t_sort)   # T = dummy slot
    tile_eid = jnp.clip(
        jnp.searchsorted(pad_end, jnp.arange(n_tiles, dtype=jnp.int32) * tile_g,
                         side="right"),
        0, n_experts - 1).astype(jnp.int32)

    w1c = w1.astype(in_dtype)
    w2c = w2.astype(in_dtype)
    b1_3d = b1.reshape(n_experts, 1, d_ff)
    b2_3d = b2.reshape(n_experts, 1, d_model)

    extra = {} if vmem_limit_bytes is None else {"vmem_limit_bytes": int(vmem_limit_bytes)}

    out_slab = pl.pallas_call(
        _expert_ffn_kernel,
        out_shape=jax.ShapeDtypeStruct((P, d_model), x.dtype),
        grid_spec=pltpu.PrefetchScalarGridSpec(
            num_scalar_prefetch=1,
            grid=(n_tiles, n_ff),
            in_specs=[
                # grouped token slab and per-row combine weights: indexed by row tile
                pl.BlockSpec((tile_g, d_model), lambda r, f, eid: (r, 0)),
                pl.BlockSpec((tile_g, 1), lambda r, f, eid: (r, 0)),
                # this tile's expert weights, data-dependent via the prefetched map;
                # consecutive same-expert tiles keep the same block index -> DMA elided
                pl.BlockSpec((None, d_model, ffc), lambda r, f, eid: (eid[r], 0, f)),
                pl.BlockSpec((None, 1, ffc), lambda r, f, eid: (eid[r], 0, f)),
                pl.BlockSpec((None, ffc, d_model), lambda r, f, eid: (eid[r], f, 0)),
                pl.BlockSpec((None, 1, d_model), lambda r, f, eid: (eid[r], 0, 0)),
            ],
            out_specs=pl.BlockSpec((tile_g, d_model), lambda r, f, eid: (r, 0)),
            scratch_shapes=[pltpu.VMEM((tile_g, d_model), jnp.float32)],
        ),
        compiler_params=pltpu.CompilerParams(
            dimension_semantics=("parallel", "arbitrary"), **extra),
    )(tile_eid, x_slab, rw_slab, w1c, b1_3d, w2c, b2_3d)

    # ---- combine: scatter-add weighted expert outputs back to their tokens ----
    out2d = jnp.zeros((T + 1, d_model), jnp.float32)
    out2d = out2d.at[tok_slab].add(out_slab.astype(jnp.float32))
    return out2d[:T].astype(x.dtype).reshape(seq, batch, d_model)


def moe_layer_ref(x, gate_w, gate_b, w1, b1, w2, b2, *, n_experts_per_token=2):
    """Pure-JAX reference with the module's forward semantics (for correctness)."""
    seq, batch, d_model = x.shape
    n_experts = w1.shape[0]
    x2d = x.reshape(seq * batch, d_model).astype(jnp.float32)
    logits = x2d @ gate_w.astype(jnp.float32) + gate_b.astype(jnp.float32)
    vals, idx = lax.top_k(logits, n_experts_per_token)
    probs = jax.nn.softmax(vals, axis=-1)
    out = jnp.zeros_like(x2d)
    for e in range(n_experts):
        we = jnp.sum(probs * (idx == e).astype(jnp.float32), axis=-1, keepdims=True)
        y = jnp.maximum(x2d @ w1[e].astype(jnp.float32) + b1[e], 0.0)
        y = y @ w2[e].astype(jnp.float32) + b2[e]
        out = out + we * y
    return out.reshape(seq, batch, d_model).astype(x.dtype)


if __name__ == "__main__":
    # Small shapes consistent with the module.
    seq, batch, d_model = 8, 2, 32
    d_ff = 256
    n_experts = 8
    n_experts_per_token = 2

    key = jax.random.PRNGKey(0)
    kx, kg, kgb, k1, kb1, k2, kb2 = jax.random.split(key, 7)

    x = jax.random.normal(kx, (seq, batch, d_model), dtype=jnp.float32)

    # Deterministic synthetic init (PyTorch's _get_clones deepcopies the expert, so all
    # experts start identical; distinct weights here exercise the routing).
    scale = 0.1
    gate_w = scale * jax.random.normal(kg, (d_model, n_experts), dtype=jnp.float32)
    gate_b = scale * jax.random.normal(kgb, (n_experts,), dtype=jnp.float32)
    w1 = scale * jax.random.normal(k1, (n_experts, d_model, d_ff), dtype=jnp.float32)
    b1 = scale * jax.random.normal(kb1, (n_experts, d_ff), dtype=jnp.float32)
    w2 = scale * jax.random.normal(k2, (n_experts, d_ff, d_model), dtype=jnp.float32)
    b2 = scale * jax.random.normal(kb2, (n_experts, d_model), dtype=jnp.float32)

    ref = moe_layer_ref(x, gate_w, gate_b, w1, b1, w2, b2,
                        n_experts_per_token=n_experts_per_token)

    # Tiny token tile so several experts span multiple tiles and intra-tile padding is
    # exercised; production default is tile_g=512 (see docstring).
    out = moe_layer_pallas(x, gate_w, gate_b, w1, b1, w2, b2,
                           n_experts_per_token=n_experts_per_token, tile_g=8)
    out = jax.block_until_ready(out)
    assert out.shape == (seq, batch, d_model)
    assert jnp.allclose(out, ref, rtol=5e-3, atol=5e-3), "mismatch vs reference (full d_ff)"

    # Exercise the d_ff-chunked accumulator path (needed on v7x at production d_ff).
    out2 = moe_layer_pallas(x, gate_w, gate_b, w1, b1, w2, b2,
                            n_experts_per_token=n_experts_per_token,
                            tile_g=8, block_ff=128)
    out2 = jax.block_until_ready(out2)
    assert jnp.allclose(out2, ref, rtol=5e-3, atol=5e-3), "mismatch vs reference (block_ff)"

    print("KERNEL_OK")
</pallas_src>

<mosaic_0001>
module attributes {stable_mosaic.version = 11 : i64} {
  func.func @_expert_ffn_kernel(%arg0: i32, %arg1: i32, %arg2: memref<12xi32, #tpu.memory_space<smem>>, %arg3: memref<8x32xf32, #tpu.memory_space<vmem>>, %arg4: memref<8x1xf32, #tpu.memory_space<vmem>>, %arg5: memref<1x32x256xf32, #tpu.memory_space<vmem>>, %arg6: memref<1x1x256xf32, #tpu.memory_space<vmem>>, %arg7: memref<1x256x32xf32, #tpu.memory_space<vmem>>, %arg8: memref<1x1x32xf32, #tpu.memory_space<vmem>>, %arg9: memref<8x32xf32, #tpu.memory_space<vmem>>, %arg10: memref<8x32xf32, #tpu.memory_space<vmem>>) attributes {dimension_semantics = [#tpu.dimension_semantics<parallel>, #tpu.dimension_semantics<arbitrary>], iteration_bounds = array<i64: 12, 1>, scalar_prefetch = 1 : i64, scratch_operands = 1 : i64, tpu.core_type = #tpu.core_type<tc>, window_params = [{transform_indices = @transform_0, window_bounds = array<i64: 8, 32>}, {transform_indices = @transform_1, window_bounds = array<i64: 8, 1>}, {transform_indices = @transform_2, window_bounds = array<i64: 1, 32, 256>}, {transform_indices = @transform_3, window_bounds = array<i64: 1, 1, 256>}, {transform_indices = @transform_4, window_bounds = array<i64: 1, 256, 32>}, {transform_indices = @transform_5, window_bounds = array<i64: 1, 1, 32>}, {transform_indices = @transform_6, window_bounds = array<i64: 8, 32>}]} {
    %c0_i32 = arith.constant 0 : i32
    %0 = arith.cmpi eq, %arg1, %c0_i32 : i32
    %1 = arith.extui %0 : i1 to i32
    %c0_i32_0 = arith.constant 0 : i32
    %2 = arith.cmpi ne, %1, %c0_i32_0 : i32
    scf.if %2 {
      %cst_19 = arith.constant 0.000000e+00 : f32
      %22 = vector.broadcast %cst_19 : f32 to vector<8x32xf32>
      %c0_20 = arith.constant 0 : index
      %c0_21 = arith.constant 0 : index
      %23 = vector.load %arg10[%c0_20, %c0_21] : memref<8x32xf32, #tpu.memory_space<vmem>>, vector<8x32xf32>
      tpu.vector_store %arg10[%c0_20, %c0_21], %22 {strides = array<i32>} : memref<8x32xf32, #tpu.memory_space<vmem>>, vector<8x32xf32>,
    } else {
    }
    %c0 = arith.constant 0 : index
    %c0_1 = arith.constant 0 : index
    %3 = vector.load %arg3[%c0, %c0_1] : memref<8x32xf32, #tpu.memory_space<vmem>>, vector<8x32xf32>
    %c0_2 = arith.constant 0 : index
    %c0_3 = arith.constant 0 : index
    %c0_4 = arith.constant 0 : index
    %4 = vector.load %arg5[%c0_2, %c0_3, %c0_4] : memref<1x32x256xf32, #tpu.memory_space<vmem>>, vector<1x32x256xf32>
    %5 = vector.shape_cast %4 : vector<1x32x256xf32> to vector<32x256xf32>
    %cst = arith.constant dense<0.000000e+00> : vector<8x256xf32>
    %6 = tpu.matmul %3, %5, %cst {dimension_numbers = #tpu.dot_dimension_numbers<[1], [0], [0], [1], [0, 0, 1, 1], [], []>} : vector<8x32xf32>, vector<32x256xf32>, vector<8x256xf32> -> vector<8x256xf32>
    %c0_5 = arith.constant 0 : index
    %c0_6 = arith.constant 0 : index
    %c0_7 = arith.constant 0 : index
    %7 = vector.load %arg6[%c0_5, %c0_6, %c0_7] : memref<1x1x256xf32, #tpu.memory_space<vmem>>, vector<1x1x256xf32>
    %8 = vector.shape_cast %7 : vector<1x1x256xf32> to vector<1x256xf32>
    %9 = vector.broadcast %8 : vector<1x256xf32> to vector<8x256xf32>
    %10 = arith.addf %6, %9 : vector<8x256xf32>
    %cst_8 = arith.constant 0.000000e+00 : f32
    %11 = vector.broadcast %cst_8 : f32 to vector<8x256xf32>
    %12 = arith.maximumf %10, %11 : vector<8x256xf32>
    %c0_9 = arith.constant 0 : index
    %c0_10 = arith.constant 0 : index
    %13 = vector.load %arg10[%c0_9, %c0_10] : memref<8x32xf32, #tpu.memory_space<vmem>>, vector<8x32xf32>
    %c0_11 = arith.constant 0 : index
    %c0_12 = arith.constant 0 : index
    %c0_13 = arith.constant 0 : index
    %14 = vector.load %arg7[%c0_11, %c0_12, %c0_13] : memref<1x256x32xf32, #tpu.memory_space<vmem>>, vector<1x256x32xf32>
    %15 = vector.shape_cast %14 : vector<1x256x32xf32> to vector<256x32xf32>
    %cst_14 = arith.constant dense<0.000000e+00> : vector<8x32xf32>
    %16 = tpu.matmul %12, %15, %cst_14 {dimension_numbers = #tpu.dot_dimension_numbers<[1], [0], [0], [1], [0, 0, 1, 1], [], []>} : vector<8x256xf32>, vector<256x32xf32>, vector<8x32xf32> -> vector<8x32xf32>
    %17 = arith.addf %13, %16 : vector<8x32xf32>
    %c0_15 = arith.constant 0 : index
    %c0_16 = arith.constant 0 : index
    %18 = vector.load %arg10[%c0_15, %c0_16] : memref<8x32xf32, #tpu.memory_space<vmem>>, vector<8x32xf32>
    tpu.vector_store %arg10[%c0_15, %c0_16], %17 {strides = array<i32>} : memref<8x32xf32, #tpu.memory_space<vmem>>, vector<8x32xf32>,
    %c0_i32_17 = arith.constant 0 : i32
    %19 = arith.cmpi eq, %arg1, %c0_i32_17 : i32
    %20 = arith.extui %19 : i1 to i32
    %c0_i32_18 = arith.constant 0 : i32
    %21 = arith.cmpi ne, %20, %c0_i32_18 : i32
    scf.if %21 {
      %c0_19 = arith.constant 0 : index
      %c0_20 = arith.constant 0 : index
      %22 = vector.load %arg10[%c0_19, %c0_20] : memref<8x32xf32, #tpu.memory_space<vmem>>, vector<8x32xf32>
      %c0_21 = arith.constant 0 : index
      %c0_22 = arith.constant 0 : index
      %c0_23 = arith.constant 0 : index
      %23 = vector.load %arg8[%c0_21, %c0_22, %c0_23] : memref<1x1x32xf32, #tpu.memory_space<vmem>>, vector<1x1x32xf32>
      %24 = vector.shape_cast %23 : vector<1x1x32xf32> to vector<1x32xf32>
      %25 = vector.broadcast %24 : vector<1x32xf32> to vector<8x32xf32>
      %26 = arith.addf %22, %25 : vector<8x32xf32>
      %c0_24 = arith.constant 0 : index
      %c0_25 = arith.constant 0 : index
      %27 = vector.load %arg4[%c0_24, %c0_25] : memref<8x1xf32, #tpu.memory_space<vmem>>, vector<8x1xf32>
      %28 = vector.broadcast %27 : vector<8x1xf32> to vector<8x32xf32>
      %29 = arith.mulf %28, %26 : vector<8x32xf32>
      %c0_26 = arith.constant 0 : index
      %c0_27 = arith.constant 0 : index
      %30 = vector.load %arg9[%c0_26, %c0_27] : memref<8x32xf32, #tpu.memory_space<vmem>>, vector<8x32xf32>
      tpu.vector_store %arg9[%c0_26, %c0_27], %29 {strides = array<i32>} : memref<8x32xf32, #tpu.memory_space<vmem>>, vector<8x32xf32>,
    } else {
    }
    return
  }
  func.func @transform_0(%arg0: i32, %arg1: i32, %arg2: memref<12xi32, #tpu.memory_space<smem>>) -> (i32, i32) {
    %c0_i32 = arith.constant 0 : i32
    %c0_i32_0 = arith.constant 0 : i32
    return %arg0, %c0_i32 : i32, i32
  }
  func.func @transform_1(%arg0: i32, %arg1: i32, %arg2: memref<12xi32, #tpu.memory_space<smem>>) -> (i32, i32) {
    %c0_i32 = arith.constant 0 : i32
    %c0_i32_0 = arith.constant 0 : i32
    return %arg0, %c0_i32 : i32, i32
  }
  func.func @transform_2(%arg0: i32, %arg1: i32, %arg2: memref<12xi32, #tpu.memory_space<smem>>) -> (i32, i32, i32) {
    %0 = arith.index_cast %arg0 : i32 to index
    %1 = memref.load %arg2[%0] : memref<12xi32, #tpu.memory_space<smem>>
    %c0_i32 = arith.constant 0 : i32
    %c0_i32_0 = arith.constant 0 : i32
    return %1, %c0_i32, %arg1 : i32, i32, i32
  }
  func.func @transform_3(%arg0: i32, %arg1: i32, %arg2: memref<12xi32, #tpu.memory_space<smem>>) -> (i32, i32, i32) {
    %0 = arith.index_cast %arg0 : i32 to index
    %1 = memref.load %arg2[%0] : memref<12xi32, #tpu.memory_space<smem>>
    %c0_i32 = arith.constant 0 : i32
    %c0_i32_0 = arith.constant 0 : i32
    return %1, %c0_i32, %arg1 : i32, i32, i32
  }
  func.func @transform_4(%arg0: i32, %arg1: i32, %arg2: memref<12xi32, #tpu.memory_space<smem>>) -> (i32, i32, i32) {
    %0 = arith.index_cast %arg0 : i32 to index
    %1 = memref.load %arg2[%0] : memref<12xi32, #tpu.memory_space<smem>>
    %c0_i32 = arith.constant 0 : i32
    %c0_i32_0 = arith.constant 0 : i32
    return %1, %arg1, %c0_i32 : i32, i32, i32
  }
  func.func @transform_5(%arg0: i32, %arg1: i32, %arg2: memref<12xi32, #tpu.memory_space<smem>>) -> (i32, i32, i32) {
    %0 = arith.index_cast %arg0 : i32 to index
    %1 = memref.load %arg2[%0] : memref<12xi32, #tpu.memory_space<smem>>
    %c0_i32 = arith.constant 0 : i32
    %c0_i32_0 = arith.constant 0 : i32
    %c0_i32_1 = arith.constant 0 : i32
    return %1, %c0_i32, %c0_i32_0 : i32, i32, i32
  }
  func.func @transform_6(%arg0: i32, %arg1: i32, %arg2: memref<12xi32, #tpu.memory_space<smem>>) -> (i32, i32) {
    %c0_i32 = arith.constant 0 : i32
    %c0_i32_0 = arith.constant 0 : i32
    return %arg0, %c0_i32 : i32, i32
  }
}

</mosaic_0001>

<llo_original>
// kernel: tpu_custom_call.1
$region0: #{tpu_custom_call.1}
  #allocation0 [shape = 'u32[]', space=smem, size = 0x4, offset = 0x4, fixed_abs, tag = 'smem constant byte address 0x4 - core index']
  #allocation1 [shape = 'u32[144,128]{1,0:T(1,128)}', space=vmem, size = 0x12000, scoped, tag = 'internal scratch']
  #allocation2 [shape = 'f32[8,32]{1,0:T(8,128)}', space=vmem, size = 0x1000, scoped, tag = 'scratch operand']
  #allocation3 [shape = 's32[1]{0}', space=sflag, size = 0x4, scoped, tag = 'scoped memory for tpu_custom_call.1']
  #allocation4 [shape = 'u8[512]{0}', space=smem, size = 0x200, scoped, tag = 'prefetched SMEM operand 0']
  %s0 = inlined_call_operand.vmem [shape: s32[12], index: 0, kind: input, shape index: {}]
  %s1 = inlined_call_operand.vmem [shape: f32[96,32], index: 1, kind: input, shape index: {}]
  %s2 = inlined_call_operand.vmem [shape: f32[96,1], index: 2, kind: input, shape index: {}]
  %s3 = inlined_call_operand.vmem [shape: f32[8,32,256], index: 3, kind: input, shape index: {}]
  %s4 = inlined_call_operand.vmem [shape: f32[8,1,256], index: 4, kind: input, shape index: {}]
  %s5 = inlined_call_operand.vmem [shape: f32[8,256,32], index: 5, kind: input, shape index: {}]
  %s6 = inlined_call_operand.vmem [shape: f32[8,1,32], index: 6, kind: input, shape index: {}]
  %s7 = inlined_call_operand.vmem [shape: f32[96,32], index: 7, kind: output, shape index: {}]
  %s8 = sld [smem:[#allocation0]]
  $region65: #{tpu_custom_call.1} parent=0
    _
  %s10 = ssub.s32 1, %s8
  %s11 = scalar_select 0, %s10, %s8
  %s12 = sshll.u32 %s0, 4
  %s13 = int_to_ptr.vmem [resolvable:$true] %s12
  %15 = dma.vmem_to_smem %s13, 16, [#allocation4], [#allocation3]
  %16 = dma.done [#allocation3], 16
  %17 = sfence
  loop: start=0, step=1, limit=14
  $region2: #{tpu_custom_call.1} parent=0 // loop_pre_header
    _
  $region3: #{tpu_custom_call.1} parent=0 // loop_header
    %s19 = sphi 0, %s23
    %p20 = scmp.ge.s32.totalorder %s19, 14
    %s26 = sphi 0, %s38
    %s27 = sphi 0, %s34
    %s28 = sphi 0, %s26
    %s29 = sphi 0, %s27
    %s30 = sphi 0, %s28
    %s31 = sphi 0, %s29
    %s41 = sphi 0, %s43
    %s44 = sphi 0, %s41
    %s45 = sphi 0, %s44
    %s61 = sphi 0, %s45
    %s67 = sphi 0, %s69
    %s70 = sphi 0, %s67
    %s71 = sphi 0, %s70
    %s87 = sphi 0, %s71
    %s97 = sphi 0, %s99
    %s100 = sphi 0, %s97
    %s101 = sphi 0, %s100
    %s117 = sphi 0, %s101
    %s127 = sphi 0, %s129
    %s130 = sphi 0, %s127
    %s131 = sphi 0, %s130
    %s147 = sphi 0, %s131
    %s157 = sphi 0, %s159
    %s160 = sphi 0, %s157
    %s161 = sphi 0, %s160
    %s177 = sphi 0, %s161
    %s185 = sphi 0, %s187
    %s188 = sphi 0, %s185
    %s189 = sphi 0, %s188
    %s205 = sphi 0, %s189
    %s211 = sphi 0, %s213
    %s214 = sphi 0, %s211
    %s215 = sphi 0, %s214
    %s231 = sphi 0, %s215
  $region4: #{tpu_custom_call.1} parent=0 // loop_header_branch
    %22 = sbr.rel (%p20) target = $region8
  $region5: #{tpu_custom_call.1} parent=0 // loop_body
    %s24 = ssub.s32 %s19, 1
    %s25 = ssub.s32 %s19, 2
    %s32 = sadd.s32 1, %s27
    %p33 = scmp.ge.s32.totalorder %s32, 1
    %s34 = scalar_select %p33, 0, %s32
    %s35 = sadd.s32 1, %s26
    %s36 = scalar_select %p33, %s35, %s26
    %p37 = scmp.ge.s32.totalorder %s36, 12
    %s38 = scalar_select %p37, 0, %s36
    %s39 = ssub.s32 %s26, %s38
    %p40 = scmp.eq.s32.totalorder %s39, 0
    %s42 = sadd.s32 %s41, 1
    %s43 = scalar_select %p40, %s41, %s42
    %p46 = pneg %p40
    %p47 = scmp.eq.s32.totalorder %s19, 11
    %p48 = por %p46, %p47
    %p49 = scmp.ne.s32.totalorder %s41, %s44
    %p50 = scmp.eq.s32.totalorder %s19, 0
    %p51 = por %p49, %p50
    %p52 = scmp.ne.s32.totalorder %s41, %s44
    %p53 = scmp.eq.s32.totalorder %s24, 11
    %p54 = por %p52, %p53
    %p55 = scmp.ne.s32.totalorder %s44, %s45
    %p56 = scmp.eq.s32.totalorder %s24, 0
    %p57 = por %p55, %p56
    %p58 = scmp.ne.s32.totalorder %s44, %s45
    %p59 = scmp.eq.s32.totalorder %s25, 11
    %p60 = por %p58, %p59
    %p62 = scmp.ne.s32.totalorder %s45, %s61
    %p63 = scmp.eq.s32.totalorder %s25, 0
    %p64 = por %p62, %p63
    %s65 = ssub.s32 %s26, %s38
    %p66 = scmp.eq.s32.totalorder %s65, 0
    %s68 = sadd.s32 %s67, 1
    %s69 = scalar_select %p66, %s67, %s68
    %p72 = pneg %p66
    %p73 = scmp.eq.s32.totalorder %s19, 11
    %p74 = por %p72, %p73
    %p75 = scmp.ne.s32.totalorder %s67, %s70
    %p76 = scmp.eq.s32.totalorder %s19, 0
    %p77 = por %p75, %p76
    %p78 = scmp.ne.s32.totalorder %s67, %s70
    %p79 = scmp.eq.s32.totalorder %s24, 11
    %p80 = por %p78, %p79
    %p81 = scmp.ne.s32.totalorder %s70, %s71
    %p82 = scmp.eq.s32.totalorder %s24, 0
    %p83 = por %p81, %p82
    %p84 = scmp.ne.s32.totalorder %s70, %s71
    %p85 = scmp.eq.s32.totalorder %s25, 11
    %p86 = por %p84, %p85
    %p88 = scmp.ne.s32.totalorder %s71, %s87
    %p89 = scmp.eq.s32.totalorder %s25, 0
    %p90 = por %p88, %p89
    %s91 = sld [smem:[#allocation4 + %s26]]
    %s92 = sld [smem:[#allocation4 + %s38]]
    %s93 = ssub.s32 %s91, %s92
    %s94 = ssub.s32 %s27, %s34
    %s95 = sor.u32 %s93, %s94
    %p96 = scmp.eq.s32.totalorder %s95, 0
    %s98 = sadd.s32 %s97, 1
    %s99 = scalar_select %p96, %s97, %s98
    %p102 = pneg %p96
    %p103 = scmp.eq.s32.totalorder %s19, 11
    %p104 = por %p102, %p103
    %p105 = scmp.ne.s32.totalorder %s97, %s100
    %p106 = scmp.eq.s32.totalorder %s19, 0
    %p107 = por %p105, %p106
    %p108 = scmp.ne.s32.totalorder %s97, %s100
    %p109 = scmp.eq.s32.totalorder %s24, 11
    %p110 = por %p108, %p109
    %p111 = scmp.ne.s32.totalorder %s100, %s101
    %p112 = scmp.eq.s32.totalorder %s24, 0
    %p113 = por %p111, %p112
    %p114 = scmp.ne.s32.totalorder %s100, %s101
    %p115 = scmp.eq.s32.totalorder %s25, 11
    %p116 = por %p114, %p115
    %p118 = scmp.ne.s32.totalorder %s101, %s117
    %p119 = scmp.eq.s32.totalorder %s25, 0
    %p120 = por %p118, %p119
    %s121 = sld [smem:[#allocation4 + %s26]]
    %s122 = sld [smem:[#allocation4 + %s38]]
    %s123 = ssub.s32 %s121, %s122
    %s124 = ssub.s32 %s27, %s34
    %s125 = sor.u32 %s123, %s124
    %p126 = scmp.eq.s32.totalorder %s125, 0
    %s128 = sadd.s32 %s127, 1
    %s129 = scalar_select %p126, %s127, %s128
    %p132 = pneg %p126
    %p133 = scmp.eq.s32.totalorder %s19, 11
    %p134 = por %p132, %p133
    %p135 = scmp.ne.s32.totalorder %s127, %s130
    %p136 = scmp.eq.s32.totalorder %s19, 0
    %p137 = por %p135, %p136
    %p138 = scmp.ne.s32.totalorder %s127, %s130
    %p139 = scmp.eq.s32.totalorder %s24, 11
    %p140 = por %p138, %p139
    %p141 = scmp.ne.s32.totalorder %s130, %s131
    %p142 = scmp.eq.s32.totalorder %s24, 0
    %p143 = por %p141, %p142
    %p144 = scmp.ne.s32.totalorder %s130, %s131
    %p145 = scmp.eq.s32.totalorder %s25, 11
    %p146 = por %p144, %p145
    %p148 = scmp.ne.s32.totalorder %s131, %s147
    %p149 = scmp.eq.s32.totalorder %s25, 0
    %p150 = por %p148, %p149
    %s151 = sld [smem:[#allocation4 + %s26]]
    %s152 = sld [smem:[#allocation4 + %s38]]
    %s153 = ssub.s32 %s151, %s152
    %s154 = ssub.s32 %s27, %s34
    %s155 = sor.u32 %s153, %s154
    %p156 = scmp.eq.s32.totalorder %s155, 0
    %s158 = sadd.s32 %s157, 1
    %s159 = scalar_select %p156, %s157, %s158
    %p162 = pneg %p156
    %p163 = scmp.eq.s32.totalorder %s19, 11
    %p164 = por %p162, %p163
    %p165 = scmp.ne.s32.totalorder %s157, %s160
    %p166 = scmp.eq.s32.totalorder %s19, 0
    %p167 = por %p165, %p166
    %p168 = scmp.ne.s32.totalorder %s157, %s160
    %p169 = scmp.eq.s32.totalorder %s24, 11
    %p170 = por %p168, %p169
    %p171 = scmp.ne.s32.totalorder %s160, %s161
    %p172 = scmp.eq.s32.totalorder %s24, 0
    %p173 = por %p171, %p172
    %p174 = scmp.ne.s32.totalorder %s160, %s161
    %p175 = scmp.eq.s32.totalorder %s25, 11
    %p176 = por %p174, %p175
    %p178 = scmp.ne.s32.totalorder %s161, %s177
    %p179 = scmp.eq.s32.totalorder %s25, 0
    %p180 = por %p178, %p179
    %s181 = sld [smem:[#allocation4 + %s26]]
    %s182 = sld [smem:[#allocation4 + %s38]]
    %s183 = ssub.s32 %s181, %s182
    %p184 = scmp.eq.s32.totalorder %s183, 0
    %s186 = sadd.s32 %s185, 1
    %s187 = scalar_select %p184, %s185, %s186
    %p190 = pneg %p184
    %p191 = scmp.eq.s32.totalorder %s19, 11
    %p192 = por %p190, %p191
    %p193 = scmp.ne.s32.totalorder %s185, %s188
    %p194 = scmp.eq.s32.totalorder %s19, 0
    %p195 = por %p193, %p194
    %p196 = scmp.ne.s32.totalorder %s185, %s188
    %p197 = scmp.eq.s32.totalorder %s24, 11
    %p198 = por %p196, %p197
    %p199 = scmp.ne.s32.totalorder %s188, %s189
    %p200 = scmp.eq.s32.totalorder %s24, 0
    %p201 = por %p199, %p200
    %p202 = scmp.ne.s32.totalorder %s188, %s189
    %p203 = scmp.eq.s32.totalorder %s25, 11
    %p204 = por %p202, %p203
    %p206 = scmp.ne.s32.totalorder %s189, %s205
    %p207 = scmp.eq.s32.totalorder %s25, 0
    %p208 = por %p206, %p207
    %s209 = ssub.s32 %s26, %s38
    %p210 = scmp.eq.s32.totalorder %s209, 0
    %s212 = sadd.s32 %s211, 1
    %s213 = scalar_select %p210, %s211, %s212
    %p216 = pneg %p210
    %p217 = scmp.eq.s32.totalorder %s19, 11
    %p218 = por %p216, %p217
    %p219 = scmp.ne.s32.totalorder %s211, %s214
    %p220 = scmp.eq.s32.totalorder %s19, 0
    %p221 = por %p219, %p220
    %p222 = scmp.ne.s32.totalorder %s211, %s214
    %p223 = scmp.eq.s32.totalorder %s24, 11
    %p224 = por %p222, %p223
    %p225 = scmp.ne.s32.totalorder %s214, %s215
    %p226 = scmp.eq.s32.totalorder %s24, 0
    %p227 = por %p225, %p226
    %p228 = scmp.ne.s32.totalorder %s214, %s215
    %p229 = scmp.eq.s32.totalorder %s25, 11
    %p230 = por %p228, %p229
    %p232 = scmp.ne.s32.totalorder %s215, %s231
    %p233 = scmp.eq.s32.totalorder %s25, 0
    %p234 = por %p232, %p233
    %p235 = scmp.le.s32.totalorder 1, %s19
    %p236 = scmp.lt.s32.totalorder %s19, 13
    %p237 = pnand %p235, %p236
    %p238 = pneg %p237
    // Predicated region
    $region9: #{tpu_custom_call.1} parent=5 // pred_check
      _
    $region10: #{tpu_custom_call.1} parent=5 // pred_check_branch
      %240 = sbr.rel (%p237) target = $region12
    $region11: #{tpu_custom_call.1} parent=5 // pred_region
      %s241 = ssub.s32 %s19, 1
    $region12: #{tpu_custom_call.1} parent=5 // pred_fallthru
      _
    %p242 = scmp.lt.s32.totalorder %s19, 12
    // Predicated region
    $region13: #{tpu_custom_call.1} parent=5 // pred_check
      %p243 = pneg %p242
    $region14: #{tpu_custom_call.1} parent=5 // pred_check_branch
      %245 = sbr.rel (%p243) target = $region16
    $region15: #{tpu_custom_call.1} parent=5 // pred_region
      // Predicated region
      $region17: #{tpu_custom_call.1} parent=15 // pred_check
        %p246 = pneg %p51
      $region18: #{tpu_custom_call.1} parent=15 // pred_check_branch
        %248 = sbr.rel (%p246) target = $region20
      $region19: #{tpu_custom_call.1} parent=15 // pred_region
        %p249 = scmp.lt.s32.totalorder %s26, 11
        %s250 = scalar_select %p249, %s26, 11
        %s251 = smul.addr %s250, 8
        %s252 = scalar_lea.vmem %s1, %s251
      $region20: #{tpu_custom_call.1} parent=15 // pred_fallthru
        _
      // Predicated region
      $region21: #{tpu_custom_call.1} parent=15 // pred_check
        %p253 = pneg %p77
      $region22: #{tpu_custom_call.1} parent=15 // pred_check_branch
        %255 = sbr.rel (%p253) target = $region24
      $region23: #{tpu_custom_call.1} parent=15 // pred_region
        %p256 = scmp.lt.s32.totalorder %s26, 11
        %s257 = scalar_select %p256, %s26, 11
        %s258 = smul.addr %s257, 8
        %s259 = scalar_lea.vmem %s2, %s258
      $region24: #{tpu_custom_call.1} parent=15 // pred_fallthru
        _
      // Predicated region
      $region25: #{tpu_custom_call.1} parent=15 // pred_check
        %p260 = pneg %p107
      $region26: #{tpu_custom_call.1} parent=15 // pred_check_branch
        %262 = sbr.rel (%p260) target = $region28
      $region27: #{tpu_custom_call.1} parent=15 // pred_region
        %s263 = sld [smem:[#allocation4 + %s26]]
        %s264 = smul.u32 2, %s27
        %p265 = scmp.lt.s32.totalorder %s263, 7
        %s266 = scalar_select %p265, %s263, 7
        %p267 = scmp.lt.s32.totalorder %s264, 1
        %s268 = scalar_select %p267, %s264, 1
        %s269 = smul.addr %s266, 8
        %s270 = sadd.s32 %s268, %s269
        %s271 = smul.addr %s270, 8
        %s272 = scalar_lea.vmem %s3, %s271
        %s273 = sld [smem:[#allocation4 + %s26]]
        %s274 = smul.u32 2, %s27
      $region28: #{tpu_custom_call.1} parent=15 // pred_fallthru
        _
      // Predicated region
      $region29: #{tpu_custom_call.1} parent=15 // pred_check
        %p275 = pneg %p137
      $region30: #{tpu_custom_call.1} parent=15 // pred_check_branch
        %277 = sbr.rel (%p275) target = $region32
      $region31: #{tpu_custom_call.1} parent=15 // pred_region
        %s278 = sld [smem:[#allocation4 + %s26]]
        %s279 = smul.u32 2, %s27
        %p280 = scmp.lt.s32.totalorder %s278, 7
        %s281 = scalar_select %p280, %s278, 7
        %p282 = scmp.lt.s32.totalorder %s279, 1
        %s283 = scalar_select %p282, %s279, 1
        %s284 = smul.addr %s281, 2
        %s285 = sadd.s32 %s283, %s284
        %s286 = scalar_lea.vmem %s4, %s285
        %s287 = sld [smem:[#allocation4 + %s26]]
        %s288 = smul.u32 2, %s27
      $region32: #{tpu_custom_call.1} parent=15 // pred_fallthru
        _
      // Predicated region
      $region33: #{tpu_custom_call.1} parent=15 // pred_check
        %p289 = pneg %p167
      $region34: #{tpu_custom_call.1} parent=15 // pred_check_branch
        %291 = sbr.rel (%p289) target = $region36
      $region35: #{tpu_custom_call.1} parent=15 // pred_region
        %s292 = sld [smem:[#allocation4 + %s26]]
        %s293 = smul.u32 32, %s27
        %p294 = scmp.lt.s32.totalorder %s292, 7
        %s295 = scalar_select %p294, %s292, 7
        %p296 = scmp.lt.s32.totalorder %s293, 31
        %s297 = scalar_select %p296, %s293, 31
        %s298 = smul.addr %s295, 32
        %s299 = sadd.s32 %s297, %s298
        %s300 = smul.addr %s299, 8
        %s301 = scalar_lea.vmem %s5, %s300
        %s302 = sld [smem:[#allocation4 + %s26]]
        %s303 = smul.u32 32, %s27
      $region36: #{tpu_custom_call.1} parent=15 // pred_fallthru
        _
      // Predicated region
      $region37: #{tpu_custom_call.1} parent=15 // pred_check
        %p304 = pneg %p195
      $region38: #{tpu_custom_call.1} parent=15 // pred_check_branch
        %306 = sbr.rel (%p304) target = $region40
      $region39: #{tpu_custom_call.1} parent=15 // pred_region
        %s307 = sld [smem:[#allocation4 + %s26]]
        %p308 = scmp.lt.s32.totalorder %s307, 7
        %s309 = scalar_select %p308, %s307, 7
        %s310 = scalar_lea.vmem %s6, %s309
        %s311 = sld [smem:[#allocation4 + %s26]]
      $region40: #{tpu_custom_call.1} parent=15 // pred_fallthru
        _
    $region16: #{tpu_custom_call.1} parent=5 // pred_fallthru
      _
    %p312 = scmp.le.s32.totalorder 1, %s19
    %p313 = scmp.lt.s32.totalorder %s19, 13
    %p314 = pnand %p312, %p313
    %p315 = pneg %p314
    // Predicated region
    $region41: #{tpu_custom_call.1} parent=5 // pred_check
      _
    $region42: #{tpu_custom_call.1} parent=5 // pred_check_branch
      %317 = sbr.rel (%p314) target = $region44
    $region43: #{tpu_custom_call.1} parent=5 // pred_region
      %s318 = ssub.s32 %s19, 1
      %p319 = scmp.lt.s32.totalorder %s28, 11
      %s320 = scalar_select %p319, %s28, 11
      %s321 = smul.addr %s320, 8
      %s322 = scalar_lea.vmem %s1, %s321
      %p323 = pneg %p57
      %p324 = pneg %p54
      %p325 = scmp.lt.s32.totalorder %s28, 11
      %s326 = scalar_select %p325, %s28, 11
      %s327 = smul.addr %s326, 8
      %s328 = scalar_lea.vmem %s2, %s327
      %p329 = pneg %p83
      %p330 = pneg %p80
      %s331 = sld [smem:[#allocation4 + %s28]]
      %s332 = smul.u32 2, %s29
      %p333 = scmp.lt.s32.totalorder %s331, 7
      %s334 = scalar_select %p333, %s331, 7
      %p335 = scmp.lt.s32.totalorder %s332, 1
      %s336 = scalar_select %p335, %s332, 1
      %s337 = smul.addr %s334, 8
      %s338 = sadd.s32 %s336, %s337
      %s339 = smul.addr %s338, 8
      %s340 = scalar_lea.vmem %s3, %s339
      %p341 = pneg %p113
      %p342 = pneg %p110
      %s343 = sld [smem:[#allocation4 + %s28]]
      %s344 = smul.u32 2, %s29
      %p345 = scmp.lt.s32.totalorder %s343, 7
      %s346 = scalar_select %p345, %s343, 7
      %p347 = scmp.lt.s32.totalorder %s344, 1
      %s348 = scalar_select %p347, %s344, 1
      %s349 = smul.addr %s346, 2
      %s350 = sadd.s32 %s348, %s349
      %s351 = scalar_lea.vmem %s4, %s350
      %p352 = pneg %p143
      %p353 = pneg %p140
      %s354 = sld [smem:[#allocation4 + %s28]]
      %s355 = smul.u32 32, %s29
      %p356 = scmp.lt.s32.totalorder %s354, 7
      %s357 = scalar_select %p356, %s354, 7
      %p358 = scmp.lt.s32.totalorder %s355, 31
      %s359 = scalar_select %p358, %s355, 31
      %s360 = smul.addr %s357, 32
      %s361 = sadd.s32 %s359, %s360
      %s362 = smul.addr %s361, 8
      %s363 = scalar_lea.vmem %s5, %s362
      %p364 = pneg %p173
      %p365 = pneg %p170
      %s366 = sld [smem:[#allocation4 + %s28]]
      %p367 = scmp.lt.s32.totalorder %s366, 7
      %s368 = scalar_select %p367, %s366, 7
      %s369 = scalar_lea.vmem %s6, %s368
      %p370 = pneg %p201
      %p371 = pneg %p198
      %p372 = pneg %p227
      %p373 = pneg %p224
      %p374 = scmp.lt.s32.totalorder %s28, 11
      %s375 = scalar_select %p374, %s28, 11
      %s376 = smul.addr %s375, 8
      %s377 = scalar_lea.vmem %s7, %s376
      %p378 = scmp.lt.s32.totalorder %s28, 11
      %s379 = scalar_select %p378, %s28, 11
      %s380 = smul.addr %s379, 8
      %s381 = scalar_lea.vmem %s1, %s380
      %p382 = scmp.lt.s32.totalorder %s28, 11
      %s383 = scalar_select %p382, %s28, 11
      %s384 = smul.addr %s383, 8
      %s385 = scalar_lea.vmem %s2, %s384
      %s386 = sld [smem:[#allocation4 + %s28]]
      %s387 = smul.u32 2, %s29
      %p388 = scmp.lt.s32.totalorder %s386, 7
      %s389 = scalar_select %p388, %s386, 7
      %p390 = scmp.lt.s32.totalorder %s387, 1
      %s391 = scalar_select %p390, %s387, 1
      %s392 = smul.addr %s389, 8
      %s393 = sadd.s32 %s391, %s392
      %s394 = smul.addr %s393, 8
      %s395 = scalar_lea.vmem %s3, %s394
      %s396 = sld [smem:[#allocation4 + %s28]]
      %s397 = smul.u32 2, %s29
      %s398 = sld [smem:[#allocation4 + %s28]]
      %s399 = smul.u32 2, %s29
      %p400 = scmp.lt.s32.totalorder %s398, 7
      %s401 = scalar_select %p400, %s398, 7
      %p402 = scmp.lt.s32.totalorder %s399, 1
      %s403 = scalar_select %p402, %s399, 1
      %s404 = smul.addr %s401, 2
      %s405 = sadd.s32 %s403, %s404
      %s406 = scalar_lea.vmem %s4, %s405
      %s407 = sld [smem:[#allocation4 + %s28]]
      %s408 = smul.u32 2, %s29
      %s409 = sld [smem:[#allocation4 + %s28]]
      %s410 = smul.u32 32, %s29
      %p411 = scmp.lt.s32.totalorder %s409, 7
      %s412 = scalar_select %p411, %s409, 7
      %p413 = scmp.lt.s32.totalorder %s410, 31
      %s414 = scalar_select %p413, %s410, 31
      %s415 = smul.addr %s412, 32
      %s416 = sadd.s32 %s414, %s415
      %s417 = smul.addr %s416, 8
      %s418 = scalar_lea.vmem %s5, %s417
      %s419 = sld [smem:[#allocation4 + %s28]]
      %s420 = smul.u32 32, %s29
      %s421 = sld [smem:[#allocation4 + %s28]]
      %p422 = scmp.lt.s32.totalorder %s421, 7
      %s423 = scalar_select %p422, %s421, 7
      %s424 = scalar_lea.vmem %s6, %s423
      %s425 = sld [smem:[#allocation4 + %s28]]
      %p426 = scmp.lt.s32.totalorder %s28, 11
      %s427 = scalar_select %p426, %s28, 11
      %s428 = smul.addr %s427, 8
      %s429 = scalar_lea.vmem %s7, %s428
      %p430 = scmp.eq.s32.totalorder %s29, 0
      // Predicated region
      $region45: #{tpu_custom_call.1} parent=43 // pred_check
        %p431 = pneg %p430
      $region46: #{tpu_custom_call.1} parent=43 // pred_check_branch
        %433 = sbr.rel (%p431) target = $region48
      $region47: #{tpu_custom_call.1} parent=43 // pred_region
        %vm434 = vcmask 261120
        %435 = vst.msk [vmem:[#allocation2] sm:$0xff] %vm434, 0.0
      $region48: #{tpu_custom_call.1} parent=43 // pred_fallthru
        _
      %v436 = vld [vmem:[%s381] sm:$0xff]
      %v437 = vld [vmem:[%s395] sm:$0xff]
      %v438 = vld [vmem:[%s395 + $0x8] sm:$0xff]
      %v439 = vld [vmem:[%s395 + $0x10] sm:$0xff]
      %v440 = vld [vmem:[%s395 + $0x18] sm:$0xff]
      %v441 = vld [vmem:[%s395 + $0x20] sm:$0xff]
      %v442 = vld [vmem:[%s395 + $0x28] sm:$0xff]
      %v443 = vld [vmem:[%s395 + $0x30] sm:$0xff]
      %v444 = vld [vmem:[%s395 + $0x38] sm:$0xff]
      %v445 = vld [vmem:[%s406] sm:$0x3]
      %v447 = vlaneseq
      %v448 = vshrl.u32 %v447, 7
      %v449 = vsub.s32 0, %v448
      %v450 = vrot.slane %v445, %v449
      %v451 = vlaneseq
      %v452 = vshrl.u32 %v451, 7
      %v453 = vsub.s32 1, %v452
      %v454 = vrot.slane %v445, %v453
      %vm457 = vcmask 261120
      %v459 = vsel %vm457, %v436, 0
      %461 = vmatprep.subr.mxu0 0.0
      %462 = vmatpush1.msra.mxu0 0.0
      %463 = vmatprep.subr.mxu0 0.0
      %464 = vmatpush1.msra.mxu0 0.0
      %465 = vmatprep.subr.mxu0 0.0
      %466 = vmatpush1.msra.mxu0 0.0
      %467 = vmatprep.subr.mxu0 0.0
      %468 = vmatpush1.msra.mxu0 0.0
      %469 = vmatprep.subr.mxu0 0.0
      %470 = vmatpush1.msra.mxu0 0.0
      %471 = vmatprep.subr.mxu0 0.0
      %472 = vmatpush1.msra.mxu0 0.0
      %473 = vmatprep.subr.mxu0 0.0
      %474 = vmatpush1.msra.mxu0 0.0
      %475 = vmatprep.subr.mxu0 0.0
      %476 = vmatpush1.msra.mxu0 0.0
      %477 = vmatprep.subr.mxu0 0.0
      %478 = vmatpush1.msra.mxu0 0.0
      %479 = vmatprep.subr.mxu0 0.0
      %480 = vmatpush1.msra.mxu0 0.0
      %481 = vmatprep.subr.mxu0 0.0
      %482 = vmatpush1.msra.mxu0 0.0
      %483 = vmatprep.subr.mxu0 0.0
      %484 = vmatpush1.msra.mxu0 0.0
      %485 = vmatprep.subr.mxu0 %v444
      %486 = vmatpush1.msra.mxu0 %v443
      %487 = vmatprep.subr.mxu0 %v442
      %488 = vmatpush1.msra.mxu0 %v441
      %489 = vmatprep.subr.mxu0 %v440
      %490 = vmatpush1.msra.mxu0 %v439
      %491 = vmatprep.subr.mxu0 %v438
      %492 = vmatpush1.msra.mxu0 %v437
      %493 = vmatprep.subr.mxu0 0.0
      %494 = vmatpush2.msra.mxu0 0.0
      %495 = vmatprep.subr.mxu0 0.0
      %496 = vmatpush2.msra.mxu0 0.0
      %497 = vmatprep.subr.mxu0 0.0
      %498 = vmatpush2.msra.mxu0 0.0
      %499 = vmatprep.subr.mxu0 0.0
      %500 = vmatpush2.msra.mxu0 0.0
      %501 = vmatprep.subr.mxu0 0.0
      %502 = vmatpush2.msra.mxu0 0.0
      %503 = vmatprep.subr.mxu0 0.0
      %504 = vmatpush2.msra.mxu0 0.0
      %505 = vmatprep.subr.mxu0 0.0
      %506 = vmatpush2.msra.mxu0 0.0
      %507 = vmatprep.subr.mxu0 0.0
      %508 = vmatpush2.msra.mxu0 0.0
      %509 = vmatprep.subr.mxu0 0.0
      %510 = vmatpush2.msra.mxu0 0.0
      %511 = vmatprep.subr.mxu0 0.0
      %512 = vmatpush2.msra.mxu0 0.0
      %513 = vmatprep.subr.mxu0 0.0
      %514 = vmatpush2.msra.mxu0 0.0
      %515 = vmatprep.subr.mxu0 0.0
      %516 = vmatpush2.msra.mxu0 0.0
      %517 = vmatprep.subr.mxu0 0.0
      %518 = vmatpush2.msra.mxu0 0.0
      %519 = vmatprep.subr.mxu0 0.0
      %520 = vmatpush2.msra.mxu0 0.0
      %521 = vmatprep.subr.mxu0 0.0
      %522 = vmatpush2.msra.mxu0 0.0
      %523 = vmatprep.subr.mxu0 0.0
      %524 = vmatpush2.msra.mxu0 0.0
      %525 = vmatprep.mubr.f32.mxu0 0.0
      %526 = vmatmul.mubr.f32.gmra.mxu0 %v459
      %v527 = vpop.f32.mrf.mxu0
      %v528 = vadd.f32 %v450, %v527
      %v529 = vpop.f32.mrf.mxu0
      %v530 = vadd.f32 %v454, %v529
      %531 = vdwg.mxu0
      %v532 = vmax.f32 %v528, 0.0
      %v533 = vmax.f32 %v530, 0.0
      %v534 = vld [vmem:[#allocation2] sm:$0xff]
      %v535 = vld [vmem:[%s418] sm:$0xff]
      %v536 = vld [vmem:[%s418 + $0x8] sm:$0xff]
      %v537 = vld [vmem:[%s418 + $0x10] sm:$0xff]
      %v538 = vld [vmem:[%s418 + $0x18] sm:$0xff]
      %v539 = vld [vmem:[%s418 + $0x20] sm:$0xff]
      %v540 = vld [vmem:[%s418 + $0x28] sm:$0xff]
      %v541 = vld [vmem:[%s418 + $0x30] sm:$0xff]
      %v542 = vld [vmem:[%s418 + $0x38] sm:$0xff]
      %v543 = vld [vmem:[%s418 + $0x40] sm:$0xff]
      %v544 = vld [vmem:[%s418 + $0x48] sm:$0xff]
      %v545 = vld [vmem:[%s418 + $0x50] sm:$0xff]
      %v546 = vld [vmem:[%s418 + $0x58] sm:$0xff]
      %v547 = vld [vmem:[%s418 + $0x60] sm:$0xff]
      %v548 = vld [vmem:[%s418 + $0x68] sm:$0xff]
      %v549 = vld [vmem:[%s418 + $0x70] sm:$0xff]
      %v550 = vld [vmem:[%s418 + $0x78] sm:$0xff]
      %v551 = vld [vmem:[%s418 + $0x80] sm:$0xff]
      %v552 = vld [vmem:[%s418 + $0x88] sm:$0xff]
      %v553 = vld [vmem:[%s418 + $0x90] sm:$0xff]
      %v554 = vld [vmem:[%s418 + $0x98] sm:$0xff]
      %v555 = vld [vmem:[%s418 + $0xa0] sm:$0xff]
      %v556 = vld [vmem:[%s418 + $0xa8] sm:$0xff]
      %v557 = vld [vmem:[%s418 + $0xb0] sm:$0xff]
      %v558 = vld [vmem:[%s418 + $0xb8] sm:$0xff]
      %v559 = vld [vmem:[%s418 + $0xc0] sm:$0xff]
      %v560 = vld [vmem:[%s418 + $0xc8] sm:$0xff]
      %v561 = vld [vmem:[%s418 + $0xd0] sm:$0xff]
      %v562 = vld [vmem:[%s418 + $0xd8] sm:$0xff]
      %v563 = vld [vmem:[%s418 + $0xe0] sm:$0xff]
      %v564 = vld [vmem:[%s418 + $0xe8] sm:$0xff]
      %v565 = vld [vmem:[%s418 + $0xf0] sm:$0xff]
      %v566 = vld [vmem:[%s418 + $0xf8] sm:$0xff]
      %567 = vmatprep.subr.mxu0 0.0
      %568 = vmatpush1.msra.mxu0 %v550
      %569 = vmatprep.subr.mxu0 0.0
      %570 = vmatpush1.msra.mxu0 %v549
      %571 = vmatprep.subr.mxu0 0.0
      %572 = vmatpush1.msra.mxu0 %v548
      %573 = vmatprep.subr.mxu0 0.0
      %574 = vmatpush1.msra.mxu0 %v547
      %575 = vmatprep.subr.mxu0 0.0
      %576 = vmatpush1.msra.mxu0 %v546
      %577 = vmatprep.subr.mxu0 0.0
      %578 = vmatpush1.msra.mxu0 %v545
      %579 = vmatprep.subr.mxu0 0.0
      %580 = vmatpush1.msra.mxu0 %v544
      %581 = vmatprep.subr.mxu0 0.0
      %582 = vmatpush1.msra.mxu0 %v543
      %583 = vmatprep.subr.mxu0 0.0
      %584 = vmatpush1.msra.mxu0 %v542
      %585 = vmatprep.subr.mxu0 0.0
      %586 = vmatpush1.msra.mxu0 %v541
      %587 = vmatprep.subr.mxu0 0.0
      %588 = vmatpush1.msra.mxu0 %v540
      %589 = vmatprep.subr.mxu0 0.0
      %590 = vmatpush1.msra.mxu0 %v539
      %591 = vmatprep.subr.mxu0 0.0
      %592 = vmatpush1.msra.mxu0 %v538
      %593 = vmatprep.subr.mxu0 0.0
      %594 = vmatpush1.msra.mxu0 %v537
      %595 = vmatprep.subr.mxu0 0.0
      %596 = vmatpush1.msra.mxu0 %v536
      %597 = vmatprep.subr.mxu0 0.0
      %598 = vmatpush1.msra.mxu0 %v535
      %599 = vmatprep.subr.mxu0 0.0
      %600 = vmatpush2.msra.mxu0 %v566
      %601 = vmatprep.subr.mxu0 0.0
      %602 = vmatpush2.msra.mxu0 %v565
      %603 = vmatprep.subr.mxu0 0.0
      %604 = vmatpush2.msra.mxu0 %v564
      %605 = vmatprep.subr.mxu0 0.0
      %606 = vmatpush2.msra.mxu0 %v563
      %607 = vmatprep.subr.mxu0 0.0
      %608 = vmatpush2.msra.mxu0 %v562
      %609 = vmatprep.subr.mxu0 0.0
      %610 = vmatpush2.msra.mxu0 %v561
      %611 = vmatprep.subr.mxu0 0.0
      %612 = vmatpush2.msra.mxu0 %v560
      %613 = vmatprep.subr.mxu0 0.0
      %614 = vmatpush2.msra.mxu0 %v559
      %615 = vmatprep.subr.mxu0 0.0
      %616 = vmatpush2.msra.mxu0 %v558
      %617 = vmatprep.subr.mxu0 0.0
      %618 = vmatpush2.msra.mxu0 %v557
      %619 = vmatprep.subr.mxu0 0.0
      %620 = vmatpush2.msra.mxu0 %v556
      %621 = vmatprep.subr.mxu0 0.0
      %622 = vmatpush2.msra.mxu0 %v555
      %623 = vmatprep.subr.mxu0 0.0
      %624 = vmatpush2.msra.mxu0 %v554
      %625 = vmatprep.subr.mxu0 0.0
      %626 = vmatpush2.msra.mxu0 %v553
      %627 = vmatprep.subr.mxu0 0.0
      %628 = vmatpush2.msra.mxu0 %v552
      %629 = vmatprep.subr.mxu0 0.0
      %630 = vmatpush2.msra.mxu0 %v551
      %631 = vmatprep.mubr.f32.mxu0 %v533
      %632 = vmatmul.mubr.f32.gmra.mxu0 %v532
      %v633 = vpop.f32.mrf.mxu0
      %v634 = vadd.f32 0.0, %v633
      %v635 = vpop.f32.mrf.mxu0
      %636 = vdwg.mxu0
      %v637 = vadd.f32 %v534, %v634
      %638 = vst.msk [vmem:[#allocation2] sm:$0xff] %vm457, %v637
      // Predicated region
      $region49: #{tpu_custom_call.1} parent=43 // pred_check
        %p639 = pneg %p430
      $region50: #{tpu_custom_call.1} parent=43 // pred_check_branch
        %641 = sbr.rel (%p639) target = $region52
      $region51: #{tpu_custom_call.1} parent=43 // pred_region
        %v642 = vld [vmem:[#allocation2] sm:$0xff]
        %v643 = vld [vmem:[%s424] sm:$0x1]
        %v645 = vlaneseq
        %v646 = vshrl.u32 %v645, 7
        %v647 = vsub.s32 0, %v646
        %v648 = vrot.slane %v643, %v647
        %v650 = vadd.f32 %v642, %v648
        %v651 = vld [vmem:[%s385] sm:$0xff]
        %653 = vset.pattern.permute.xlu0 0
        %654 = vperm.xlu0 %653, %v651
        %v655 = vpop.permute.xlu0 %654
        %v657 = vmul.f32 %v655, %v650
        %658 = vst.msk [vmem:[%s429] sm:$0xff] %vm457, %v657
      $region52: #{tpu_custom_call.1} parent=43 // pred_fallthru
        _
      %p659 = scmp.lt.s32.totalorder %s28, 11
      %s660 = scalar_select %p659, %s28, 11
      %s661 = smul.addr %s660, 8
      %s662 = scalar_lea.vmem %s7, %s661
      // Predicated region
      $region53: #{tpu_custom_call.1} parent=43 // pred_check
        %p663 = pneg %p224
      $region54: #{tpu_custom_call.1} parent=43 // pred_check_branch
        %665 = sbr.rel (%p663) target = $region56
      $region55: #{tpu_custom_call.1} parent=43 // pred_region
        _
      $region56: #{tpu_custom_call.1} parent=43 // pred_fallthru
        _
    $region44: #{tpu_custom_call.1} parent=5 // pred_fallthru
      _
    %p666 = scmp.le.s32.totalorder 2, %s19
    // Predicated region
    $region57: #{tpu_custom_call.1} parent=5 // pred_check
      %p667 = pneg %p666
    $region58: #{tpu_custom_call.1} parent=5 // pred_check_branch
      %669 = sbr.rel (%p667) target = $region60
    $region59: #{tpu_custom_call.1} parent=5 // pred_region
      %s670 = ssub.s32 %s19, 2
      // Predicated region
      $region61: #{tpu_custom_call.1} parent=59 // pred_check
        %p671 = pneg %p230
      $region62: #{tpu_custom_call.1} parent=59 // pred_check_branch
        %673 = sbr.rel (%p671) target = $region64
      $region63: #{tpu_custom_call.1} parent=59 // pred_region
        %p674 = scmp.lt.s32.totalorder %s30, 11
        %s675 = scalar_select %p674, %s30, 11
        %s676 = smul.addr %s675, 8
        %s677 = scalar_lea.vmem %s7, %s676
      $region64: #{tpu_custom_call.1} parent=59 // pred_fallthru
        _
    $region60: #{tpu_custom_call.1} parent=5 // pred_fallthru
      _
  $region6: #{tpu_custom_call.1} parent=0 // loop_footer
    %s23 = sadd.s32 1, %s19
  $region7: #{tpu_custom_call.1} parent=0 // loop_footer_branch
    %18 = sbr.rel target = $region3
  $region8: #{tpu_custom_call.1} parent=0 // loop_exit
    _

</llo_original>
